<compile_context>
chip_gen: v7x
topology: tpu7x:2x2x1
jax: 0.10.0
libtpu: 0.0.40
codegen_flags: <defaults>
</compile_context>

<pallas_src>
import jax
import jax.numpy as jnp
from jax import lax
from jax.experimental import pallas as pl
from jax.experimental.pallas import tpu as pltpu


# --------------------------------------------------------------------------------------
# Pallas kernel
# --------------------------------------------------------------------------------------
def _make_downsample_kernel(N, Wo, C):
    """N = Ho*Wo output pixels per image; input block has N + halo rows (halo = zeros)."""

    def kernel(x_ref, w_ref, b_ref, out_ref):
        # x_ref : (Np, 4C) bf16, per-output-pixel phase packing [eo | ee | oe | oo],
        #         rows [N, Np) are host-written zeros (bottom "same" padding).
        # w_ref : (9C, C) bf16 packed tap matrices  [centre(4C) | down(2C) | right(2C) | dr(C)]
        # b_ref : (1, C)  f32 bias
        # out_ref: (N, C) bf16

        # --- packed weights: static, 8-aligned sublane slices ---
        wc = w_ref[0:4 * C, :]                 # centre taps (0,0)(0,1)(1,0)(1,1)
        wd = w_ref[4 * C:6 * C, :]             # taps (2,0)(2,1)  -> row oy+1
        wr = w_ref[6 * C:8 * C, :]             # taps (0,2)(1,2)  -> col ox+1 (masked)
        wdr = w_ref[8 * C:9 * C, :]            # tap  (2,2)       -> oy+1, ox+1 (masked)

        # --- shifted input views: plain static slices, bottom padding comes from the
        #     host zero halo, right padding from the post-matmul mask ---
        xc = x_ref[0:N, :]                     # (N, 4C) centre
        xd = x_ref[Wo:Wo + N, 0:2 * C]         # (N, 2C) {eo,ee} at (oy+1, ox)
        xr = x_ref[1:1 + N, C:3 * C]           # (N, 2C) {ee,oe} at (oy, ox+1)
        xdr = x_ref[Wo + 1:Wo + 1 + N, C:2 * C]  # (N, C)  {ee}   at (oy+1, ox+1)

        # --- four bf16 matmuls, f32 accumulation ---
        acc = jnp.dot(xc, wc, preferred_element_type=jnp.float32)
        acc = acc + jnp.dot(xd, wd, preferred_element_type=jnp.float32)

        masked = jnp.dot(xr, wr, preferred_element_type=jnp.float32)
        masked = masked + jnp.dot(xdr, wdr, preferred_element_type=jnp.float32)

        # right-edge mask applied once, post-matmul (zeroing the product row ==
        # zeroing the shifted input row), single (N,1)->(N,C) broadcast.
        ox = lax.broadcasted_iota(jnp.int32, (N, 1), 0) % Wo
        mask_r = ox < (Wo - 1)
        acc = acc + jnp.where(mask_r, masked, 0.0)

        out_ref[...] = (acc + b_ref[...]).astype(out_ref.dtype)

    return kernel


# --------------------------------------------------------------------------------------
# Host wrapper
# --------------------------------------------------------------------------------------
def downsample_forward(x_nchw, conv_w, conv_b):
    """Equivalent to: pad right/bottom by 1 (zeros), then Conv2d(C, C, 3, stride=2)."""
    B, C, H, W = x_nchw.shape
    assert conv_w.shape == (C, C, 3, 3)
    assert H % 2 == 0 and W % 2 == 0, "even spatial dims expected"
    Ho, Wo = H // 2, W // 2
    N = Ho * Wo
    halo = ((Wo + 1 + 7) // 8) * 8            # zero rows appended below the image
    Np = N + halo

    # --- host layout plumbing: NCHW -> NHWC -> stride-2 phase packing -------------
    x = jnp.transpose(x_nchw, (0, 2, 3, 1))                       # (B, H, W, C)
    xee = x[:, 0::2, 0::2, :]
    xeo = x[:, 0::2, 1::2, :]
    xoe = x[:, 1::2, 0::2, :]
    xoo = x[:, 1::2, 1::2, :]
    # channel order [eo | ee | oe | oo]: "down" taps use cols [0,2C), "right" taps
    # use cols [C,3C), both contiguous.
    xcat = jnp.concatenate([xeo, xee, xoe, xoo], axis=-1)         # (B, Ho, Wo, 4C)
    xcat = xcat.reshape(B, N, 4 * C)
    xcat = jnp.pad(xcat, ((0, 0), (0, halo), (0, 0)))             # zero bottom halo
    xcat = xcat.astype(jnp.bfloat16)                              # (B, Np, 4C)

    # --- one packed bf16 weight operand (9C, C), matching the channel order -------
    wt = jnp.transpose(conv_w, (2, 3, 1, 0))                      # (ky, kx, Cin, Cout)
    w_all = jnp.concatenate(
        [
            wt[0, 1], wt[0, 0], wt[1, 0], wt[1, 1],   # centre, rows [eo|ee|oe|oo]
            wt[2, 1], wt[2, 0],                        # down   ({eo,ee} <-> cols 0:2C)
            wt[0, 2], wt[1, 2],                        # right  ({ee,oe} <-> cols C:3C)
            wt[2, 2],                                  # down-right (ee <-> cols C:2C)
        ],
        axis=0,
    ).astype(jnp.bfloat16)                                        # (9C, C)
    bias = conv_b.reshape(1, C).astype(jnp.float32)

    # --- generation-aware VMEM budget (no double counting: blocks are already x2) --
    in_bytes = Np * 4 * C * 2          # bf16 input block
    out_bytes = N * C * 2              # bf16 output block
    w_bytes = 9 * C * C * 2            # bf16 packed weights
    b_bytes = C * 4                    # f32 bias
    needed = 2 * (in_bytes + out_bytes) + 2 * (w_bytes + b_bytes)  # double-buffered
    try:
        phys = int(pltpu.get_tpu_info().vmem_capacity_bytes)
    except Exception:
        phys = 64 * 1024 * 1024        # most conservative per-TensorCore VMEM (v7x)
    vmem_limit = int(min(max(needed + (4 << 20), 16 << 20), phys - (2 << 20)))

    kernel = _make_downsample_kernel(N, Wo, C)

    out = pl.pallas_call(
        kernel,
        out_shape=jax.ShapeDtypeStruct((B, N, C), jnp.bfloat16),
        grid=(B,),
        in_specs=[
            pl.BlockSpec((None, Np, 4 * C), lambda b: (b, 0, 0)),  # phase-packed input
            pl.BlockSpec((9 * C, C), lambda b: (0, 0)),            # packed weights
            pl.BlockSpec((1, C), lambda b: (0, 0)),                # bias
        ],
        out_specs=pl.BlockSpec((None, N, C), lambda b: (b, 0, 0)),
        compiler_params=pltpu.CompilerParams(
            dimension_semantics=("parallel",),
            vmem_limit_bytes=vmem_limit,
        ),
    )(xcat, w_all, bias)

    out = out.reshape(B, Ho, Wo, C).transpose(0, 3, 1, 2)          # back to NCHW
    return out.astype(jnp.float32)     # dtype parity with the f32 PyTorch module


# --------------------------------------------------------------------------------------
# Pure-JAX reference (mirrors the PyTorch module)
# --------------------------------------------------------------------------------------
def downsample_ref(x, w, b):
    xp = jnp.pad(x, ((0, 0), (0, 0), (0, 1), (0, 1)))              # pad right/bottom by 1
    y = lax.conv_general_dilated(
        xp, w, window_strides=(2, 2), padding="VALID",
        dimension_numbers=("NCHW", "OIHW", "NCHW"),
        precision=lax.Precision.HIGHEST)
    return y + b[None, :, None, None]


# --------------------------------------------------------------------------------------
if __name__ == "__main__":
    B, C, H, W = 2, 32, 16, 16

    key = jax.random.PRNGKey(0)
    k1, k2, k3 = jax.random.split(key, 3)
    x = jax.random.normal(k1, (B, C, H, W), jnp.float32)
    conv_w = 0.1 * jax.random.normal(k2, (C, C, 3, 3), jnp.float32)
    conv_b = 0.05 * jax.random.normal(k3, (C,), jnp.float32)

    out = downsample_forward(x, conv_w, conv_b)
    out = jax.block_until_ready(out)

    ref = downsample_ref(x, conv_w, conv_b)
    err = float(jnp.max(jnp.abs(out - ref)))
    assert out.shape == (B, C, H // 2, W // 2), out.shape
    # bf16 operands + bf16 writeback vs f32 HIGHEST reference: intentional precision trade.
    assert err < 1e-1, f"max abs error too large: {err}"

    print("KERNEL_OK")
</pallas_src>

<mosaic_0001>
module attributes {stable_mosaic.version = 11 : i64} {
  func.func @kernel(%arg0: i32, %arg1: memref<1x80x128xbf16, #tpu.memory_space<vmem>>, %arg2: memref<288x32xbf16, #tpu.memory_space<vmem>>, %arg3: memref<1x32xf32, #tpu.memory_space<vmem>>, %arg4: memref<1x64x32xbf16, #tpu.memory_space<vmem>>) attributes {dimension_semantics = [#tpu.dimension_semantics<parallel>], iteration_bounds = array<i64: 2>, scalar_prefetch = 0 : i64, scratch_operands = 0 : i64, tpu.core_type = #tpu.core_type<tc>, window_params = [{transform_indices = @transform_0, window_bounds = array<i64: 1, 80, 128>}, {pipeline_mode = #tpu.pipeline_mode<synchronous>, transform_indices = @transform_1, window_bounds = array<i64: 288, 32>}, {pipeline_mode = #tpu.pipeline_mode<synchronous>, transform_indices = @transform_2, window_bounds = array<i64: 1, 32>}, {transform_indices = @transform_3, window_bounds = array<i64: 1, 64, 32>}]} {
    %c0 = arith.constant 0 : index
    %c0_0 = arith.constant 0 : index
    %0 = vector.load %arg2[%c0, %c0_0] : memref<288x32xbf16, #tpu.memory_space<vmem>>, vector<128x32xbf16>
    %c128 = arith.constant 128 : index
    %c0_1 = arith.constant 0 : index
    %1 = vector.load %arg2[%c128, %c0_1] : memref<288x32xbf16, #tpu.memory_space<vmem>>, vector<64x32xbf16>
    %c192 = arith.constant 192 : index
    %c0_2 = arith.constant 0 : index
    %2 = vector.load %arg2[%c192, %c0_2] : memref<288x32xbf16, #tpu.memory_space<vmem>>, vector<64x32xbf16>
    %c256 = arith.constant 256 : index
    %c0_3 = arith.constant 0 : index
    %3 = vector.load %arg2[%c256, %c0_3] : memref<288x32xbf16, #tpu.memory_space<vmem>>, vector<32x32xbf16>
    %c0_4 = arith.constant 0 : index
    %c0_5 = arith.constant 0 : index
    %c0_6 = arith.constant 0 : index
    %4 = vector.load %arg1[%c0_4, %c0_5, %c0_6] : memref<1x80x128xbf16, #tpu.memory_space<vmem>>, vector<1x64x128xbf16>
    %5 = vector.shape_cast %4 : vector<1x64x128xbf16> to vector<64x128xbf16>
    %c0_7 = arith.constant 0 : index
    %c8 = arith.constant 8 : index
    %c0_8 = arith.constant 0 : index
    %6 = vector.load %arg1[%c0_7, %c8, %c0_8] : memref<1x80x128xbf16, #tpu.memory_space<vmem>>, vector<1x64x64xbf16>
    %7 = vector.shape_cast %6 : vector<1x64x64xbf16> to vector<64x64xbf16>
    %c0_9 = arith.constant 0 : index
    %c1 = arith.constant 1 : index
    %c32 = arith.constant 32 : index
    %8 = vector.load %arg1[%c0_9, %c1, %c32] : memref<1x80x128xbf16, #tpu.memory_space<vmem>>, vector<1x64x64xbf16>
    %9 = vector.shape_cast %8 : vector<1x64x64xbf16> to vector<64x64xbf16>
    %c0_10 = arith.constant 0 : index
    %c9 = arith.constant 9 : index
    %c32_11 = arith.constant 32 : index
    %10 = vector.load %arg1[%c0_10, %c9, %c32_11] : memref<1x80x128xbf16, #tpu.memory_space<vmem>>, vector<1x64x32xbf16>
    %11 = vector.shape_cast %10 : vector<1x64x32xbf16> to vector<64x32xbf16>
    %cst = arith.constant dense<0.000000e+00> : vector<64x32xf32>
    %12 = tpu.matmul %5, %0, %cst {dimension_numbers = #tpu.dot_dimension_numbers<[1], [0], [0], [1], [0, 0, 1, 1], [], []>} : vector<64x128xbf16>, vector<128x32xbf16>, vector<64x32xf32> -> vector<64x32xf32>
    %cst_12 = arith.constant dense<0.000000e+00> : vector<64x32xf32>
    %13 = tpu.matmul %7, %1, %cst_12 {dimension_numbers = #tpu.dot_dimension_numbers<[1], [0], [0], [1], [0, 0, 1, 1], [], []>} : vector<64x64xbf16>, vector<64x32xbf16>, vector<64x32xf32> -> vector<64x32xf32>
    %14 = arith.addf %12, %13 : vector<64x32xf32>
    %cst_13 = arith.constant dense<0.000000e+00> : vector<64x32xf32>
    %15 = tpu.matmul %9, %2, %cst_13 {dimension_numbers = #tpu.dot_dimension_numbers<[1], [0], [0], [1], [0, 0, 1, 1], [], []>} : vector<64x64xbf16>, vector<64x32xbf16>, vector<64x32xf32> -> vector<64x32xf32>
    %cst_14 = arith.constant dense<0.000000e+00> : vector<64x32xf32>
    %16 = tpu.matmul %11, %3, %cst_14 {dimension_numbers = #tpu.dot_dimension_numbers<[1], [0], [0], [1], [0, 0, 1, 1], [], []>} : vector<64x32xbf16>, vector<32x32xbf16>, vector<64x32xf32> -> vector<64x32xf32>
    %17 = arith.addf %15, %16 : vector<64x32xf32>
    %18 = tpu.iota {dimensions = array<i32: 0>} : vector<64x1xi32>
    %c8_i32 = arith.constant 8 : i32
    %c0_i32 = arith.constant 0 : i32
    %19 = arith.cmpi eq, %c8_i32, %c0_i32 : i32
    %c1_i32 = arith.constant 1 : i32
    %20 = arith.select %19, %c1_i32, %c8_i32 : i32
    %21 = vector.broadcast %20 : i32 to vector<64x1xi32>
    %22 = arith.remsi %18, %21 : vector<64x1xi32>
    %c0_i32_15 = arith.constant 0 : i32
    %23 = vector.broadcast %c0_i32_15 : i32 to vector<64x1xi32>
    %24 = arith.cmpi ne, %22, %23 : vector<64x1xi32>
    %c0_i32_16 = arith.constant 0 : i32
    %25 = vector.broadcast %c0_i32_16 : i32 to vector<64x1xi32>
    %26 = arith.cmpi slt, %22, %25 : vector<64x1xi32>
    %c0_i32_17 = arith.constant 0 : i32
    %27 = arith.cmpi slt, %20, %c0_i32_17 : i32
    %28 = vector.broadcast %27 : i1 to vector<64x1xi1>
    %29 = vector.broadcast %28 : vector<64x1xi1> to vector<64x1xi1>
    %30 = arith.xori %26, %29 : vector<64x1xi1>
    %31 = arith.andi %30, %24 : vector<64x1xi1>
    %32 = vector.broadcast %20 : i32 to vector<64x1xi32>
    %33 = arith.addi %22, %32 : vector<64x1xi32>
    %34 = arith.select %31, %33, %22 : vector<64x1xi1>, vector<64x1xi32>
    %c7_i32 = arith.constant 7 : i32
    %35 = vector.broadcast %c7_i32 : i32 to vector<64x1xi32>
    %36 = arith.cmpi slt, %34, %35 : vector<64x1xi32>
    %cst_18 = arith.constant 0.000000e+00 : f32
    %37 = vector.shape_cast %36 : vector<64x1xi1> to vector<64x1xi1>
    %38 = vector.broadcast %37 : vector<64x1xi1> to vector<64x32xi1>
    %39 = vector.broadcast %cst_18 : f32 to vector<64x32xf32>
    %40 = arith.select %38, %17, %39 : vector<64x32xi1>, vector<64x32xf32>
    %41 = arith.addf %14, %40 : vector<64x32xf32>
    %c0_19 = arith.constant 0 : index
    %c0_20 = arith.constant 0 : index
    %42 = vector.load %arg3[%c0_19, %c0_20] : memref<1x32xf32, #tpu.memory_space<vmem>>, vector<1x32xf32>
    %43 = vector.broadcast %42 : vector<1x32xf32> to vector<64x32xf32>
    %44 = arith.addf %41, %43 : vector<64x32xf32>
    %45 = arith.truncf %44 : vector<64x32xf32> to vector<64x32xbf16>
    %c0_21 = arith.constant 0 : index
    %c0_22 = arith.constant 0 : index
    %c0_23 = arith.constant 0 : index
    %46 = vector.load %arg4[%c0_21, %c0_22, %c0_23] : memref<1x64x32xbf16, #tpu.memory_space<vmem>>, vector<1x64x32xbf16>
    %47 = vector.shape_cast %46 : vector<1x64x32xbf16> to vector<64x32xbf16>
    %48 = vector.shape_cast %45 : vector<64x32xbf16> to vector<1x64x32xbf16>
    tpu.vector_store %arg4[%c0_21, %c0_22, %c0_23], %48 {strides = array<i32>} : memref<1x64x32xbf16, #tpu.memory_space<vmem>>, vector<1x64x32xbf16>,
    return
  }
  func.func @transform_0(%arg0: i32) -> (i32, i32, i32) {
    %c0_i32 = arith.constant 0 : i32
    %c0_i32_0 = arith.constant 0 : i32
    %c0_i32_1 = arith.constant 0 : i32
    return %arg0, %c0_i32, %c0_i32_0 : i32, i32, i32
  }
  func.func @transform_1(%arg0: i32) -> (i32, i32) {
    %c0_i32 = arith.constant 0 : i32
    %c0_i32_0 = arith.constant 0 : i32
    %c0_i32_1 = arith.constant 0 : i32
    return %c0_i32, %c0_i32_0 : i32, i32
  }
  func.func @transform_2(%arg0: i32) -> (i32, i32) {
    %c0_i32 = arith.constant 0 : i32
    %c0_i32_0 = arith.constant 0 : i32
    %c0_i32_1 = arith.constant 0 : i32
    return %c0_i32, %c0_i32_0 : i32, i32
  }
  func.func @transform_3(%arg0: i32) -> (i32, i32, i32) {
    %c0_i32 = arith.constant 0 : i32
    %c0_i32_0 = arith.constant 0 : i32
    %c0_i32_1 = arith.constant 0 : i32
    return %arg0, %c0_i32, %c0_i32_0 : i32, i32, i32
  }
}

</mosaic_0001>

<llo_original>
// kernel: tpu_custom_call.1
$region0: #{tpu_custom_call.1}
  #allocation0 [shape = 'u32[]', space=smem, size = 0x4, offset = 0x4, fixed_abs, tag = 'smem constant byte address 0x4 - core index']
  #allocation1 [shape = 'u32[144,128]{1,0:T(1,128)}', space=vmem, size = 0x12000, scoped, tag = 'internal scratch']
  %s0 = inlined_call_operand.vmem [shape: bf16[2,80,128], index: 0, kind: input, shape index: {}]
  %s1 = inlined_call_operand.vmem [shape: bf16[288,32], index: 1, kind: input, shape index: {}]
  %s2 = inlined_call_operand.vmem [shape: f32[1,32], index: 2, kind: input, shape index: {}]
  %s3 = inlined_call_operand.vmem [shape: bf16[2,64,32], index: 3, kind: output, shape index: {}]
  %s4 = sld [smem:[#allocation0]]
  $region45: #{tpu_custom_call.1} parent=0
    _
  %s6 = ssub.s32 1, %s4
  %s7 = scalar_select 0, %s6, %s4
  loop: start=0, step=1, limit=4
  $region2: #{tpu_custom_call.1} parent=0 // loop_pre_header
    _
  $region3: #{tpu_custom_call.1} parent=0 // loop_header
    %s9 = sphi 0, %s13
    %p10 = scmp.ge.s32.totalorder %s9, 4
    %s19 = sphi 0, %s21
    %s22 = sphi 0, %s19
    %s23 = sphi 0, %s22
    %s39 = sphi 0, %s23
    %s43 = sphi 0, %s43
    %s45 = sphi 0, %s43
    %s46 = sphi 0, %s45
    %s60 = sphi 0, %s46
    %s64 = sphi 0, %s64
    %s66 = sphi 0, %s64
    %s67 = sphi 0, %s66
    %s81 = sphi 0, %s67
    %s87 = sphi 0, %s89
    %s90 = sphi 0, %s87
    %s91 = sphi 0, %s90
    %s107 = sphi 0, %s91
  $region4: #{tpu_custom_call.1} parent=0 // loop_header_branch
    %12 = sbr.rel (%p10) target = $region8
  $region5: #{tpu_custom_call.1} parent=0 // loop_body
    %s14 = ssub.s32 %s9, 1
    %s15 = ssub.s32 %s9, 2
    %s16 = sadd.s32 %s9, 1
    %s17 = ssub.s32 %s9, %s16
    %p18 = scmp.eq.s32.totalorder %s17, 0
    %s20 = sadd.s32 %s19, 1
    %s21 = scalar_select %p18, %s19, %s20
    %p24 = pneg %p18
    %p25 = scmp.eq.s32.totalorder %s9, 1
    %p26 = por %p24, %p25
    %p27 = scmp.ne.s32.totalorder %s19, %s22
    %p28 = scmp.eq.s32.totalorder %s9, 0
    %p29 = por %p27, %p28
    %p30 = scmp.ne.s32.totalorder %s19, %s22
    %p31 = scmp.eq.s32.totalorder %s14, 1
    %p32 = por %p30, %p31
    %p33 = scmp.ne.s32.totalorder %s22, %s23
    %p34 = scmp.eq.s32.totalorder %s14, 0
    %p35 = por %p33, %p34
    %p36 = scmp.ne.s32.totalorder %s22, %s23
    %p37 = scmp.eq.s32.totalorder %s15, 1
    %p38 = por %p36, %p37
    %p40 = scmp.ne.s32.totalorder %s23, %s39
    %p41 = scmp.eq.s32.totalorder %s15, 0
    %p42 = por %p40, %p41
    %s44 = sadd.s32 %s43, 1
    %p47 = scmp.eq.s32.totalorder %s9, 1
    %p48 = scmp.ne.s32.totalorder %s43, %s45
    %p49 = scmp.eq.s32.totalorder %s9, 0
    %p50 = por %p48, %p49
    %p51 = scmp.ne.s32.totalorder %s43, %s45
    %p52 = scmp.eq.s32.totalorder %s14, 1
    %p53 = por %p51, %p52
    %p54 = scmp.ne.s32.totalorder %s45, %s46
    %p55 = scmp.eq.s32.totalorder %s14, 0
    %p56 = por %p54, %p55
    %p57 = scmp.ne.s32.totalorder %s45, %s46
    %p58 = scmp.eq.s32.totalorder %s15, 1
    %p59 = por %p57, %p58
    %p61 = scmp.ne.s32.totalorder %s46, %s60
    %p62 = scmp.eq.s32.totalorder %s15, 0
    %p63 = por %p61, %p62
    %s65 = sadd.s32 %s64, 1
    %p68 = scmp.eq.s32.totalorder %s9, 1
    %p69 = scmp.ne.s32.totalorder %s64, %s66
    %p70 = scmp.eq.s32.totalorder %s9, 0
    %p71 = por %p69, %p70
    %p72 = scmp.ne.s32.totalorder %s64, %s66
    %p73 = scmp.eq.s32.totalorder %s14, 1
    %p74 = por %p72, %p73
    %p75 = scmp.ne.s32.totalorder %s66, %s67
    %p76 = scmp.eq.s32.totalorder %s14, 0
    %p77 = por %p75, %p76
    %p78 = scmp.ne.s32.totalorder %s66, %s67
    %p79 = scmp.eq.s32.totalorder %s15, 1
    %p80 = por %p78, %p79
    %p82 = scmp.ne.s32.totalorder %s67, %s81
    %p83 = scmp.eq.s32.totalorder %s15, 0
    %p84 = por %p82, %p83
    %s85 = ssub.s32 %s9, %s16
    %p86 = scmp.eq.s32.totalorder %s85, 0
    %s88 = sadd.s32 %s87, 1
    %s89 = scalar_select %p86, %s87, %s88
    %p92 = pneg %p86
    %p93 = scmp.eq.s32.totalorder %s9, 1
    %p94 = por %p92, %p93
    %p95 = scmp.ne.s32.totalorder %s87, %s90
    %p96 = scmp.eq.s32.totalorder %s9, 0
    %p97 = por %p95, %p96
    %p98 = scmp.ne.s32.totalorder %s87, %s90
    %p99 = scmp.eq.s32.totalorder %s14, 1
    %p100 = por %p98, %p99
    %p101 = scmp.ne.s32.totalorder %s90, %s91
    %p102 = scmp.eq.s32.totalorder %s14, 0
    %p103 = por %p101, %p102
    %p104 = scmp.ne.s32.totalorder %s90, %s91
    %p105 = scmp.eq.s32.totalorder %s15, 1
    %p106 = por %p104, %p105
    %p108 = scmp.ne.s32.totalorder %s91, %s107
    %p109 = scmp.eq.s32.totalorder %s15, 0
    %p110 = por %p108, %p109
    %p111 = scmp.le.s32.totalorder 1, %s9
    %p112 = scmp.lt.s32.totalorder %s9, 3
    %p113 = pnand %p111, %p112
    %p114 = pneg %p113
    // Predicated region
    $region9: #{tpu_custom_call.1} parent=5 // pred_check
      _
    $region10: #{tpu_custom_call.1} parent=5 // pred_check_branch
      %116 = sbr.rel (%p113) target = $region12
    $region11: #{tpu_custom_call.1} parent=5 // pred_region
      %s117 = ssub.s32 %s9, 1
      // Predicated region
      $region13: #{tpu_custom_call.1} parent=11 // pred_check
        %p118 = pneg %p56
      $region14: #{tpu_custom_call.1} parent=11 // pred_check_branch
        %120 = sbr.rel (%p118) target = $region16
      $region15: #{tpu_custom_call.1} parent=11 // pred_region
        _
      $region16: #{tpu_custom_call.1} parent=11 // pred_fallthru
        _
      // Predicated region
      $region17: #{tpu_custom_call.1} parent=11 // pred_check
        %p121 = pneg %p77
      $region18: #{tpu_custom_call.1} parent=11 // pred_check_branch
        %123 = sbr.rel (%p121) target = $region20
      $region19: #{tpu_custom_call.1} parent=11 // pred_region
        _
      $region20: #{tpu_custom_call.1} parent=11 // pred_fallthru
        _
    $region12: #{tpu_custom_call.1} parent=5 // pred_fallthru
      _
    %p124 = scmp.lt.s32.totalorder %s9, 2
    // Predicated region
    $region21: #{tpu_custom_call.1} parent=5 // pred_check
      %p125 = pneg %p124
    $region22: #{tpu_custom_call.1} parent=5 // pred_check_branch
      %127 = sbr.rel (%p125) target = $region24
    $region23: #{tpu_custom_call.1} parent=5 // pred_region
      // Predicated region
      $region25: #{tpu_custom_call.1} parent=23 // pred_check
        %p128 = pneg %p29
      $region26: #{tpu_custom_call.1} parent=23 // pred_check_branch
        %130 = sbr.rel (%p128) target = $region28
      $region27: #{tpu_custom_call.1} parent=23 // pred_region
        %p131 = scmp.lt.s32.totalorder %s9, 1
        %s132 = scalar_select %p131, %s9, 1
        %s133 = smul.addr %s132, 10
        %s134 = smul.addr %s133, 4
        %s135 = scalar_lea.vmem %s0, %s134
      $region28: #{tpu_custom_call.1} parent=23 // pred_fallthru
        _
    $region24: #{tpu_custom_call.1} parent=5 // pred_fallthru
      _
    %p136 = scmp.le.s32.totalorder 1, %s9
    %p137 = scmp.lt.s32.totalorder %s9, 3
    %p138 = pnand %p136, %p137
    %p139 = pneg %p138
    // Predicated region
    $region29: #{tpu_custom_call.1} parent=5 // pred_check
      _
    $region30: #{tpu_custom_call.1} parent=5 // pred_check_branch
      %141 = sbr.rel (%p138) target = $region32
    $region31: #{tpu_custom_call.1} parent=5 // pred_region
      %s142 = ssub.s32 %s9, 1
      %p143 = scmp.lt.s32.totalorder %s14, 1
      %s144 = scalar_select %p143, %s14, 1
      %s145 = smul.addr %s144, 10
      %s146 = smul.addr %s145, 4
      %s147 = scalar_lea.vmem %s0, %s146
      %p148 = pneg %p35
      %p149 = pneg %p32
      %p150 = pneg %p56
      %p151 = pneg %p53
      %p152 = pneg %p77
      %p153 = pneg %p74
      %p154 = pneg %p103
      %p155 = pneg %p100
      %p156 = scmp.lt.s32.totalorder %s14, 1
      %s157 = scalar_select %p156, %s14, 1
      %s158 = smul.addr %s157, 8
      %s159 = smul.addr %s158, 4
      %s160 = scalar_lea.vmem %s3, %s159
      %p161 = scmp.lt.s32.totalorder %s14, 1
      %s162 = scalar_select %p161, %s14, 1
      %s163 = smul.addr %s162, 10
      %s164 = smul.addr %s163, 4
      %s165 = scalar_lea.vmem %s0, %s164
      %p166 = scmp.lt.s32.totalorder %s14, 1
      %s167 = scalar_select %p166, %s14, 1
      %s168 = smul.addr %s167, 8
      %s169 = smul.addr %s168, 4
      %s170 = scalar_lea.vmem %s3, %s169
      %v172 = vld [vmem:[%s1] sm:$0xf]
      %v173 = vld [vmem:[%s1 + $0x4] sm:$0xf]
      %v174 = vld [vmem:[%s1 + $0x8] sm:$0xf]
      %v175 = vld [vmem:[%s1 + $0xc] sm:$0xf]
      %v176 = vld [vmem:[%s1 + $0x10] sm:$0xf]
      %v177 = vld [vmem:[%s1 + $0x14] sm:$0xf]
      %v178 = vld [vmem:[%s1 + $0x18] sm:$0xf]
      %v179 = vld [vmem:[%s1 + $0x1c] sm:$0xf]
      %v180 = vld [vmem:[%s1 + $0x20] sm:$0xf]
      %v181 = vld [vmem:[%s1 + $0x24] sm:$0xf]
      %v182 = vld [vmem:[%s1 + $0x28] sm:$0xf]
      %v183 = vld [vmem:[%s1 + $0x2c] sm:$0xf]
      %v184 = vld [vmem:[%s1 + $0x30] sm:$0xf]
      %v185 = vld [vmem:[%s1 + $0x34] sm:$0xf]
      %v186 = vld [vmem:[%s1 + $0x38] sm:$0xf]
      %v187 = vld [vmem:[%s1 + $0x3c] sm:$0xf]
      %v188 = vld [vmem:[%s1 + $0x40] sm:$0xf]
      %v189 = vld [vmem:[%s1 + $0x44] sm:$0xf]
      %v190 = vld [vmem:[%s1 + $0x48] sm:$0xf]
      %v191 = vld [vmem:[%s1 + $0x4c] sm:$0xf]
      %v192 = vld [vmem:[%s1 + $0x50] sm:$0xf]
      %v193 = vld [vmem:[%s1 + $0x54] sm:$0xf]
      %v194 = vld [vmem:[%s1 + $0x58] sm:$0xf]
      %v195 = vld [vmem:[%s1 + $0x5c] sm:$0xf]
      %v196 = vld [vmem:[%s1 + $0x60] sm:$0xf]
      %v197 = vld [vmem:[%s1 + $0x64] sm:$0xf]
      %v198 = vld [vmem:[%s1 + $0x68] sm:$0xf]
      %v199 = vld [vmem:[%s1 + $0x6c] sm:$0xf]
      %v200 = vld [vmem:[%s1 + $0x70] sm:$0xf]
      %v201 = vld [vmem:[%s1 + $0x74] sm:$0xf]
      %v202 = vld [vmem:[%s1 + $0x78] sm:$0xf]
      %v203 = vld [vmem:[%s1 + $0x7c] sm:$0xf]
      %v204 = vld [vmem:[%s1 + $0x80] sm:$0xf]
      %v205 = vld [vmem:[%s1 + $0x84] sm:$0xf]
      %v206 = vld [vmem:[%s1 + $0x88] sm:$0xf]
      %v207 = vld [vmem:[%s1 + $0x8c] sm:$0xf]
      %v208 = vld [vmem:[%s165] sm:$0xf]
      %v209 = vld [vmem:[%s165 + $0x4] sm:$0xf]
      %v210 = vld [vmem:[%s165 + $0x8] sm:$0xf]
      %v211 = vld [vmem:[%s165 + $0xc] sm:$0xf]
      %v212 = vld [vmem:[%s165 + $0x10] sm:$0xf]
      %v213 = vld [vmem:[%s165 + $0x14] sm:$0xf]
      %v214 = vld [vmem:[%s165 + $0x18] sm:$0xf]
      %v215 = vld [vmem:[%s165 + $0x1c] sm:$0xf]
      %v216 = vld [vmem:[%s165 + $0x20] sm:$0xf]
      %v217 = vld [vmem:[%s165 + $0x20] sm:$0x1]
      %v218 = vld [vmem:[%s165 + $0x4] sm:$0xf]
      %v219 = vld [vmem:[%s165 + $0x8] sm:$0xf]
      %v220 = vld [vmem:[%s165 + $0xc] sm:$0xf]
      %v221 = vld [vmem:[%s165 + $0x10] sm:$0xf]
      %v222 = vld [vmem:[%s165 + $0x14] sm:$0xf]
      %v223 = vld [vmem:[%s165 + $0x18] sm:$0xf]
      %v224 = vld [vmem:[%s165 + $0x1c] sm:$0xf]
      %v225 = vld [vmem:[%s165 + $0x20] sm:$0xf]
      %v226 = vld [vmem:[%s165 + $0x24] sm:$0x1]
      %v235 = vunpack.c.l.b16 %v209
      %v236 = vunpack.c.l.b16 %v210
      %v237 = vunpack.c.l.b16 %v211
      %v238 = vunpack.c.l.b16 %v212
      %v239 = vunpack.c.l.b16 %v213
      %v240 = vunpack.c.l.b16 %v214
      %v241 = vunpack.c.l.b16 %v215
      %v242 = vunpack.c.l.b16 %v216
      %v243 = vpack.c.b16 %v236, %v235
      %v244 = vpack.c.b16 %v238, %v237
      %v245 = vpack.c.b16 %v240, %v239
      %v246 = vpack.c.b16 %v242, %v241
      %v255 = vunpack.c.l.b16 %v188
      %v256 = vunpack.c.l.b16 %v189
      %v257 = vunpack.c.l.b16 %v190
      %v258 = vunpack.c.l.b16 %v191
      %v259 = vunpack.c.l.b16 %v192
      %v260 = vunpack.c.l.b16 %v193
      %v261 = vunpack.c.l.b16 %v194
      %v262 = vunpack.c.l.b16 %v195
      %v263 = vpack.c.b16 %v256, %v255
      %v264 = vpack.c.b16 %v258, %v257
      %v265 = vpack.c.b16 %v260, %v259
      %v266 = vpack.c.b16 %v262, %v261
      %vm271 = vcmask 523264
      %v273 = vsel %vm271, %v243, 0
      %v276 = vsel %vm271, %v244, 0
      %v279 = vsel %vm271, %v245, 0
      %v282 = vsel %vm271, %v246, 0
      %284 = vmatprep.subr.bf16.mxu0 0
      %285 = vmatpush1.bf16.msra.mxu0 %v263
      %286 = vmatprep.subr.bf16.mxu0 0
      %287 = vmatpush1.bf16.msra.mxu0 %v264
      %288 = vmatprep.subr.bf16.mxu0 0
      %289 = vmatpush1.bf16.msra.mxu0 %v265
      %290 = vmatprep.subr.bf16.mxu0 0
      %291 = vmatpush1.bf16.msra.mxu0 %v266
      %292 = vmatprep.subr.bf16.mxu0 0
      %293 = vmatpush1.bf16.msra.mxu0 0
      %294 = vmatprep.subr.bf16.mxu0 0
      %295 = vmatpush1.bf16.msra.mxu0 0
      %296 = vmatprep.subr.bf16.mxu0 0
      %297 = vmatpush1.bf16.msra.mxu0 0
      %298 = vmatprep.subr.bf16.mxu0 0
      %299 = vmatpush1.bf16.msra.mxu0 0
      %300 = vmatprep.subr.bf16.mxu0 0
      %301 = vmatpush1.bf16.msra.mxu0 0
      %302 = vmatprep.subr.bf16.mxu0 0
      %303 = vmatpush1.bf16.msra.mxu0 0
      %304 = vmatprep.subr.bf16.mxu0 0
      %305 = vmatpush1.bf16.msra.mxu0 0
      %306 = vmatprep.subr.bf16.mxu0 0
      %307 = vmatpush1.bf16.msra.mxu0 0
      %308 = vmatprep.subr.bf16.mxu0 0
      %309 = vmatpush1.bf16.msra.mxu0 0
      %310 = vmatprep.subr.bf16.mxu0 0
      %311 = vmatpush1.bf16.msra.mxu0 0
      %312 = vmatprep.subr.bf16.mxu0 0
      %313 = vmatpush1.bf16.msra.mxu0 0
      %314 = vmatprep.subr.bf16.mxu0 0
      %315 = vmatpush1.bf16.msra.mxu0 0
      %316 = vmatprep.mubr.bf16.mxu0 0
      %317 = vmatmul.mubr.bf16.gmra.mrb[0].mxu0 %v273
      %v318 = vpop.f32.mrb[0].mxu0
      %v319 = vadd.f32 0.0, %v318
      %v320 = vpop.f32.mrb[0].mxu0
      %v321 = vpop.f32.mrb[0].mxu0
      %v322 = vadd.f32 0.0, %v321
      %v323 = vpop.f32.mrb[0].mxu0
      %324 = vmatprep.mubr.bf16.mxu0 0
      %325 = vmatmul.mubr.bf16.gmra.mrb[0].mxu0 %v276
      %v326 = vpop.f32.mrb[0].mxu0
      %v327 = vadd.f32 0.0, %v326
      %v328 = vpop.f32.mrb[0].mxu0
      %v329 = vpop.f32.mrb[0].mxu0
      %v330 = vadd.f32 0.0, %v329
      %v331 = vpop.f32.mrb[0].mxu0
      %332 = vmatprep.mubr.bf16.mxu0 0
      %333 = vmatmul.mubr.bf16.gmra.mrb[0].mxu0 %v279
      %v334 = vpop.f32.mrb[0].mxu0
      %v335 = vadd.f32 0.0, %v334
      %v336 = vpop.f32.mrb[0].mxu0
      %v337 = vpop.f32.mrb[0].mxu0
      %v338 = vadd.f32 0.0, %v337
      %v339 = vpop.f32.mrb[0].mxu0
      %340 = vmatprep.mubr.bf16.mxu0 0
      %341 = vmatmul.mubr.bf16.gmra.mrb[0].mxu0 %v282
      %v342 = vpop.f32.mrb[0].mxu0
      %v343 = vadd.f32 0.0, %v342
      %v344 = vpop.f32.mrb[0].mxu0
      %v345 = vpop.f32.mrb[0].mxu0
      %v346 = vadd.f32 0.0, %v345
      %v347 = vpop.f32.mrb[0].mxu0
      %348 = vdwg.mxu0
      %v350 = vunpack.c.l.b16 %v208
      %v351 = vpack.c.b16 %v235, %v350
      %v352 = vpack.c.b16 %v237, %v236
      %v353 = vpack.c.b16 %v239, %v238
      %v354 = vpack.c.b16 %v241, %v240
      %v375 = vunpack.c.l.b16 %v172
      %v376 = vunpack.c.l.b16 %v173
      %v377 = vunpack.c.l.b16 %v174
      %v378 = vunpack.c.l.b16 %v175
      %v379 = vunpack.c.l.b16 %v176
      %v380 = vunpack.c.l.b16 %v177
      %v381 = vunpack.c.l.b16 %v178
      %v382 = vunpack.c.l.b16 %v179
      %v383 = vunpack.c.l.b16 %v180
      %v384 = vunpack.c.l.b16 %v181
      %v385 = vunpack.c.l.b16 %v182
      %v386 = vunpack.c.l.b16 %v183
      %v387 = vunpack.c.l.b16 %v184
      %v388 = vunpack.c.l.b16 %v185
      %v389 = vunpack.c.l.b16 %v186
      %v390 = vunpack.c.l.b16 %v187
      %v391 = vpack.c.b16 %v376, %v375
      %v392 = vpack.c.b16 %v378, %v377
      %v393 = vpack.c.b16 %v380, %v379
      %v394 = vpack.c.b16 %v382, %v381
      %v395 = vpack.c.b16 %v384, %v383
      %v396 = vpack.c.b16 %v386, %v385
      %v397 = vpack.c.b16 %v388, %v387
      %v398 = vpack.c.b16 %v390, %v389
      %407 = vmatprep.subr.bf16.mxu0 0
      %408 = vmatpush1.bf16.msra.mxu0 %v391
      %409 = vmatprep.subr.bf16.mxu0 0
      %410 = vmatpush1.bf16.msra.mxu0 %v392
      %411 = vmatprep.subr.bf16.mxu0 0
      %412 = vmatpush1.bf16.msra.mxu0 %v393
      %413 = vmatprep.subr.bf16.mxu0 0
      %414 = vmatpush1.bf16.msra.mxu0 %v394
      %415 = vmatprep.subr.bf16.mxu0 0
      %416 = vmatpush1.bf16.msra.mxu0 %v395
      %417 = vmatprep.subr.bf16.mxu0 0
      %418 = vmatpush1.bf16.msra.mxu0 %v396
      %419 = vmatprep.subr.bf16.mxu0 0
      %420 = vmatpush1.bf16.msra.mxu0 %v397
      %421 = vmatprep.subr.bf16.mxu0 0
      %422 = vmatpush1.bf16.msra.mxu0 %v398
      %423 = vmatprep.subr.bf16.mxu0 0
      %424 = vmatpush1.bf16.msra.mxu0 0
      %425 = vmatprep.subr.bf16.mxu0 0
      %426 = vmatpush1.bf16.msra.mxu0 0
      %427 = vmatprep.subr.bf16.mxu0 0
      %428 = vmatpush1.bf16.msra.mxu0 0
      %429 = vmatprep.subr.bf16.mxu0 0
      %430 = vmatpush1.bf16.msra.mxu0 0
      %431 = vmatprep.subr.bf16.mxu0 0
      %432 = vmatpush1.bf16.msra.mxu0 0
      %433 = vmatprep.subr.bf16.mxu0 0
      %434 = vmatpush1.bf16.msra.mxu0 0
      %435 = vmatprep.subr.bf16.mxu0 0
      %436 = vmatpush1.bf16.msra.mxu0 0
      %437 = vmatprep.subr.bf16.mxu0 0
      %438 = vmatpush1.bf16.msra.mxu0 0
      %439 = vmatprep.mubr.bf16.mxu0 0
      %440 = vmatmul.mubr.bf16.gmra.mrb[0].mxu0 %v351
      %v441 = vpop.f32.mrb[0].mxu0
      %v442 = vadd.f32 %v319, %v441
      %v443 = vpop.f32.mrb[0].mxu0
      %v444 = vpop.f32.mrb[0].mxu0
      %v445 = vadd.f32 %v322, %v444
      %v446 = vpop.f32.mrb[0].mxu0
      %447 = vmatprep.mubr.bf16.mxu0 0
      %448 = vmatmul.mubr.bf16.gmra.mrb[0].mxu0 %v352
      %v449 = vpop.f32.mrb[0].mxu0
      %v450 = vadd.f32 %v327, %v449
      %v451 = vpop.f32.mrb[0].mxu0
      %v452 = vpop.f32.mrb[0].mxu0
      %v453 = vadd.f32 %v330, %v452
      %v454 = vpop.f32.mrb[0].mxu0
      %455 = vmatprep.mubr.bf16.mxu0 0
      %456 = vmatmul.mubr.bf16.gmra.mrb[0].mxu0 %v353
      %v457 = vpop.f32.mrb[0].mxu0
      %v458 = vadd.f32 %v335, %v457
      %v459 = vpop.f32.mrb[0].mxu0
      %v460 = vpop.f32.mrb[0].mxu0
      %v461 = vadd.f32 %v338, %v460
      %v462 = vpop.f32.mrb[0].mxu0
      %463 = vmatprep.mubr.bf16.mxu0 0
      %464 = vmatmul.mubr.bf16.gmra.mrb[0].mxu0 %v354
      %v465 = vpop.f32.mrb[0].mxu0
      %v466 = vadd.f32 %v343, %v465
      %v467 = vpop.f32.mrb[0].mxu0
      %v468 = vpop.f32.mrb[0].mxu0
      %v469 = vadd.f32 %v346, %v468
      %v470 = vpop.f32.mrb[0].mxu0
      %471 = vdwg.mxu0
      %v481 = vunpack.c.l.b16 %v218
      %v482 = vunpack.c.l.b16 %v219
      %v483 = vunpack.c.l.b16 %v220
      %v484 = vunpack.c.l.b16 %v221
      %v485 = vunpack.c.l.b16 %v222
      %v486 = vunpack.c.l.b16 %v223
      %v487 = vunpack.c.l.b16 %v224
      %v488 = vunpack.c.l.b16 %v225
      %v489 = vunpack.c.l.b16 %v226
      %v490 = vpack.c.b16 %v482, %v481
      %v491 = vpack.c.b16 %v484, %v483
      %v492 = vpack.c.b16 %v486, %v485
      %v493 = vpack.c.b16 %v488, %v487
      %v494 = vpack.c.b16 %v489, %v489
      %vm495 = vsmask.f32 7424
      %v497 = vshrl.u32 %v490, 16
      %v499 = vshll.u32 %v490, 16
      %v501 = vrot.slane %v499, 1
      %v502 = vor.u32 %v497, %v501
      %v504 = vshll.u32 %v491, 16
      %v506 = vrot.slane %v504, 1
      %v507 = vsel %vm495, %v502, %v506
      %v508 = vshrl.u32 %v491, 16
      %v510 = vor.u32 %v508, %v506
      %v512 = vshll.u32 %v492, 16
      %v514 = vrot.slane %v512, 1
      %v515 = vsel %vm495, %v510, %v514
      %v516 = vshrl.u32 %v492, 16
      %v518 = vor.u32 %v516, %v514
      %v520 = vshll.u32 %v493, 16
      %v522 = vrot.slane %v520, 1
      %v523 = vsel %vm495, %v518, %v522
      %v524 = vshrl.u32 %v493, 16
      %v526 = vor.u32 %v524, %v522
      %v528 = vshll.u32 %v494, 16
      %v530 = vrot.slane %v528, 1
      %v531 = vsel %vm495, %v526, %v530
      %532 = vrot.lane.b32.xlu0 %v507, 96
      %v533 = vpop.permute.xlu0 %532
      %534 = vrot.lane.b32.xlu0 %v515, 96
      %v535 = vpop.permute.xlu0 %534
      %536 = vrot.lane.b32.xlu0 %v523, 96
      %v537 = vpop.permute.xlu0 %536
      %538 = vrot.lane.b32.xlu0 %v531, 96
      %v539 = vpop.permute.xlu0 %538
      %v544 = vunpack.c.l.b16 %v204
      %v545 = vunpack.c.l.b16 %v205
      %v546 = vunpack.c.l.b16 %v206
      %v547 = vunpack.c.l.b16 %v207
      %v548 = vpack.c.b16 %v545, %v544
      %v549 = vpack.c.b16 %v547, %v546
      %vm552 = vcmask 261120
      %v554 = vsel %vm552, %v533, 0
      %v557 = vsel %vm552, %v535, 0
      %v560 = vsel %vm552, %v537, 0
      %v563 = vsel %vm552, %v539, 0
      %565 = vmatprep.subr.bf16.mxu0 0
      %566 = vmatpush1.bf16.msra.mxu0 %v548
      %567 = vmatprep.subr.bf16.mxu0 0
      %568 = vmatpush1.bf16.msra.mxu0 %v549
      %569 = vmatprep.subr.bf16.mxu0 0
      %570 = vmatpush1.bf16.msra.mxu0 0
      %571 = vmatprep.subr.bf16.mxu0 0
      %572 = vmatpush1.bf16.msra.mxu0 0
      %573 = vmatprep.subr.bf16.mxu0 0
      %574 = vmatpush1.bf16.msra.mxu0 0
      %575 = vmatprep.subr.bf16.mxu0 0
      %576 = vmatpush1.bf16.msra.mxu0 0
      %577 = vmatprep.subr.bf16.mxu0 0
      %578 = vmatpush1.bf16.msra.mxu0 0
      %579 = vmatprep.subr.bf16.mxu0 0
      %580 = vmatpush1.bf16.msra.mxu0 0
      %581 = vmatprep.subr.bf16.mxu0 0
      %582 = vmatpush1.bf16.msra.mxu0 0
      %583 = vmatprep.subr.bf16.mxu0 0
      %584 = vmatpush1.bf16.msra.mxu0 0
      %585 = vmatprep.subr.bf16.mxu0 0
      %586 = vmatpush1.bf16.msra.mxu0 0
      %587 = vmatprep.subr.bf16.mxu0 0
      %588 = vmatpush1.bf16.msra.mxu0 0
      %589 = vmatprep.subr.bf16.mxu0 0
      %590 = vmatpush1.bf16.msra.mxu0 0
      %591 = vmatprep.subr.bf16.mxu0 0
      %592 = vmatpush1.bf16.msra.mxu0 0
      %593 = vmatprep.subr.bf16.mxu0 0
      %594 = vmatpush1.bf16.msra.mxu0 0
      %595 = vmatprep.subr.bf16.mxu0 0
      %596 = vmatpush1.bf16.msra.mxu0 0
      %597 = vmatprep.mubr.bf16.mxu0 0
      %598 = vmatmul.mubr.bf16.gmra.mrb[0].mxu0 %v554
      %v599 = vpop.f32.mrb[0].mxu0
      %v600 = vadd.f32 0.0, %v599
      %v601 = vpop.f32.mrb[0].mxu0
      %v602 = vpop.f32.mrb[0].mxu0
      %v603 = vadd.f32 0.0, %v602
      %v604 = vpop.f32.mrb[0].mxu0
      %605 = vmatprep.mubr.bf16.mxu0 0
      %606 = vmatmul.mubr.bf16.gmra.mrb[0].mxu0 %v557
      %v607 = vpop.f32.mrb[0].mxu0
      %v608 = vadd.f32 0.0, %v607
      %v609 = vpop.f32.mrb[0].mxu0
      %v610 = vpop.f32.mrb[0].mxu0
      %v611 = vadd.f32 0.0, %v610
      %v612 = vpop.f32.mrb[0].mxu0
      %613 = vmatprep.mubr.bf16.mxu0 0
      %614 = vmatmul.mubr.bf16.gmra.mrb[0].mxu0 %v560
      %v615 = vpop.f32.mrb[0].mxu0
      %v616 = vadd.f32 0.0, %v615
      %v617 = vpop.f32.mrb[0].mxu0
      %v618 = vpop.f32.mrb[0].mxu0
      %v619 = vadd.f32 0.0, %v618
      %v620 = vpop.f32.mrb[0].mxu0
      %621 = vmatprep.mubr.bf16.mxu0 0
      %622 = vmatmul.mubr.bf16.gmra.mrb[0].mxu0 %v563
      %v623 = vpop.f32.mrb[0].mxu0
      %v624 = vadd.f32 0.0, %v623
      %v625 = vpop.f32.mrb[0].mxu0
      %v626 = vpop.f32.mrb[0].mxu0
      %v627 = vadd.f32 0.0, %v626
      %v628 = vpop.f32.mrb[0].mxu0
      %629 = vdwg.mxu0
      %v631 = vunpack.c.l.b16 %v217
      %v632 = vpack.c.b16 %v631, %v631
      %v634 = vshrl.u32 %v351, 16
      %v636 = vshll.u32 %v351, 16
      %v638 = vrot.slane %v636, 1
      %v639 = vor.u32 %v634, %v638
      %v641 = vshll.u32 %v352, 16
      %v643 = vrot.slane %v641, 1
      %v644 = vsel %vm495, %v639, %v643
      %v645 = vshrl.u32 %v352, 16
      %v647 = vor.u32 %v645, %v643
      %v649 = vshll.u32 %v353, 16
      %v651 = vrot.slane %v649, 1
      %v652 = vsel %vm495, %v647, %v651
      %v653 = vshrl.u32 %v353, 16
      %v655 = vor.u32 %v653, %v651
      %v657 = vshll.u32 %v354, 16
      %v659 = vrot.slane %v657, 1
      %v660 = vsel %vm495, %v655, %v659
      %v661 = vshrl.u32 %v354, 16
      %v663 = vor.u32 %v661, %v659
      %v665 = vshll.u32 %v632, 16
      %v667 = vrot.slane %v665, 1
      %v668 = vsel %vm495, %v663, %v667
      %669 = vrot.lane.b32.xlu0 %v644, 96
      %v670 = vpop.permute.xlu0 %669
      %671 = vrot.lane.b32.xlu0 %v652, 96
      %v672 = vpop.permute.xlu0 %671
      %673 = vrot.lane.b32.xlu0 %v660, 96
      %v674 = vpop.permute.xlu0 %673
      %675 = vrot.lane.b32.xlu0 %v668, 96
      %v676 = vpop.permute.xlu0 %675
      %v685 = vunpack.c.l.b16 %v196
      %v686 = vunpack.c.l.b16 %v197
      %v687 = vunpack.c.l.b16 %v198
      %v688 = vunpack.c.l.b16 %v199
      %v689 = vunpack.c.l.b16 %v200
      %v690 = vunpack.c.l.b16 %v201
      %v691 = vunpack.c.l.b16 %v202
      %v692 = vunpack.c.l.b16 %v203
      %v693 = vpack.c.b16 %v686, %v685
      %v694 = vpack.c.b16 %v688, %v687
      %v695 = vpack.c.b16 %v690, %v689
      %v696 = vpack.c.b16 %v692, %v691
      %v702 = vsel %vm271, %v670, 0
      %v705 = vsel %vm271, %v672, 0
      %v708 = vsel %vm271, %v674, 0
      %v711 = vsel %vm271, %v676, 0
      %713 = vmatprep.subr.bf16.mxu0 0
      %714 = vmatpush1.bf16.msra.mxu0 %v693
      %715 = vmatprep.subr.bf16.mxu0 0
      %716 = vmatpush1.bf16.msra.mxu0 %v694
      %717 = vmatprep.subr.bf16.mxu0 0
      %718 = vmatpush1.bf16.msra.mxu0 %v695
      %719 = vmatprep.subr.bf16.mxu0 0
      %720 = vmatpush1.bf16.msra.mxu0 %v696
      %721 = vmatprep.subr.bf16.mxu0 0
      %722 = vmatpush1.bf16.msra.mxu0 0
      %723 = vmatprep.subr.bf16.mxu0 0
      %724 = vmatpush1.bf16.msra.mxu0 0
      %725 = vmatprep.subr.bf16.mxu0 0
      %726 = vmatpush1.bf16.msra.mxu0 0
      %727 = vmatprep.subr.bf16.mxu0 0
      %728 = vmatpush1.bf16.msra.mxu0 0
      %729 = vmatprep.subr.bf16.mxu0 0
      %730 = vmatpush1.bf16.msra.mxu0 0
      %731 = vmatprep.subr.bf16.mxu0 0
      %732 = vmatpush1.bf16.msra.mxu0 0
      %733 = vmatprep.subr.bf16.mxu0 0
      %734 = vmatpush1.bf16.msra.mxu0 0
      %735 = vmatprep.subr.bf16.mxu0 0
      %736 = vmatpush1.bf16.msra.mxu0 0
      %737 = vmatprep.subr.bf16.mxu0 0
      %738 = vmatpush1.bf16.msra.mxu0 0
      %739 = vmatprep.subr.bf16.mxu0 0
      %740 = vmatpush1.bf16.msra.mxu0 0
      %741 = vmatprep.subr.bf16.mxu0 0
      %742 = vmatpush1.bf16.msra.mxu0 0
      %743 = vmatprep.subr.bf16.mxu0 0
      %744 = vmatpush1.bf16.msra.mxu0 0
      %745 = vmatprep.mubr.bf16.mxu0 0
      %746 = vmatmul.mubr.bf16.gmra.mrb[0].mxu0 %v702
      %v747 = vpop.f32.mrb[0].mxu0
      %v748 = vadd.f32 %v600, %v747
      %v749 = vpop.f32.mrb[0].mxu0
      %v750 = vpop.f32.mrb[0].mxu0
      %v751 = vadd.f32 %v603, %v750
      %v752 = vpop.f32.mrb[0].mxu0
      %753 = vmatprep.mubr.bf16.mxu0 0
      %754 = vmatmul.mubr.bf16.gmra.mrb[0].mxu0 %v705
      %v755 = vpop.f32.mrb[0].mxu0
      %v756 = vadd.f32 %v608, %v755
      %v757 = vpop.f32.mrb[0].mxu0
      %v758 = vpop.f32.mrb[0].mxu0
      %v759 = vadd.f32 %v611, %v758
      %v760 = vpop.f32.mrb[0].mxu0
      %761 = vmatprep.mubr.bf16.mxu0 0
      %762 = vmatmul.mubr.bf16.gmra.mrb[0].mxu0 %v708
      %v763 = vpop.f32.mrb[0].mxu0
      %v764 = vadd.f32 %v616, %v763
      %v765 = vpop.f32.mrb[0].mxu0
      %v766 = vpop.f32.mrb[0].mxu0
      %v767 = vadd.f32 %v619, %v766
      %v768 = vpop.f32.mrb[0].mxu0
      %769 = vmatprep.mubr.bf16.mxu0 0
      %770 = vmatmul.mubr.bf16.gmra.mrb[0].mxu0 %v711
      %v771 = vpop.f32.mrb[0].mxu0
      %v772 = vadd.f32 %v624, %v771
      %v773 = vpop.f32.mrb[0].mxu0
      %v774 = vpop.f32.mrb[0].mxu0
      %v775 = vadd.f32 %v627, %v774
      %v776 = vpop.f32.mrb[0].mxu0
      %777 = vdwg.mxu0
      %v778 = vlaneseq
      %v779 = vshrl.u32 %v778, 7
      %v780 = vadd.s32 %v779, 8
      %v781 = vadd.s32 %v779, 16
      %v782 = vadd.s32 %v779, 24
      %v783 = vadd.s32 %v779, 32
      %v784 = vadd.s32 %v779, 40
      %v785 = vadd.s32 %v779, 48
      %v786 = vadd.s32 %v779, 56
      %vm787 = vcmp.lt.s32.totalorder %v779, 0
      %v788 = vsub.s32 0, %v779
      %v789 = vsel %vm787, %v788, %v779
      %v790 = vshrl.u32 %v789, 3
      %v791 = vand.u32 %v789, 7
      %v792 = vsub.s32 0, %v791
      %v793 = vsel %vm787, %v792, %v791
      %vm794 = vcmp.lt.s32.totalorder %v780, 0
      %v795 = vsub.s32 0, %v780
      %v796 = vsel %vm794, %v795, %v780
      %v797 = vshrl.u32 %v796, 3
      %v798 = vand.u32 %v796, 7
      %v799 = vsub.s32 0, %v798
      %v800 = vsel %vm794, %v799, %v798
      %vm801 = vcmp.lt.s32.totalorder %v781, 0
      %v802 = vsub.s32 0, %v781
      %v803 = vsel %vm801, %v802, %v781
      %v804 = vshrl.u32 %v803, 3
      %v805 = vand.u32 %v803, 7
      %v806 = vsub.s32 0, %v805
      %v807 = vsel %vm801, %v806, %v805
      %vm808 = vcmp.lt.s32.totalorder %v782, 0
      %v809 = vsub.s32 0, %v782
      %v810 = vsel %vm808, %v809, %v782
      %v811 = vshrl.u32 %v810, 3
      %v812 = vand.u32 %v810, 7
      %v813 = vsub.s32 0, %v812
      %v814 = vsel %vm808, %v813, %v812
      %vm815 = vcmp.lt.s32.totalorder %v783, 0
      %v816 = vsub.s32 0, %v783
      %v817 = vsel %vm815, %v816, %v783
      %v818 = vshrl.u32 %v817, 3
      %v819 = vand.u32 %v817, 7
      %v820 = vsub.s32 0, %v819
      %v821 = vsel %vm815, %v820, %v819
      %vm822 = vcmp.lt.s32.totalorder %v784, 0
      %v823 = vsub.s32 0, %v784
      %v824 = vsel %vm822, %v823, %v784
      %v825 = vshrl.u32 %v824, 3
      %v826 = vand.u32 %v824, 7
      %v827 = vsub.s32 0, %v826
      %v828 = vsel %vm822, %v827, %v826
      %vm829 = vcmp.lt.s32.totalorder %v785, 0
      %v830 = vsub.s32 0, %v785
      %v831 = vsel %vm829, %v830, %v785
      %v832 = vshrl.u32 %v831, 3
      %v833 = vand.u32 %v831, 7
      %v834 = vsub.s32 0, %v833
      %v835 = vsel %vm829, %v834, %v833
      %vm836 = vcmp.lt.s32.totalorder %v786, 0
      %v837 = vsub.s32 0, %v786
      %v838 = vsel %vm836, %v837, %v786
      %v839 = vshrl.u32 %v838, 3
      %v840 = vand.u32 %v838, 7
      %v841 = vsub.s32 0, %v840
      %v842 = vsel %vm836, %v841, %v840
      %vm843 = vcmp.ne.s32.totalorder %v793, 0
      %vm844 = vcmp.ne.s32.totalorder %v800, 0
      %vm845 = vcmp.ne.s32.totalorder %v807, 0
      %vm846 = vcmp.ne.s32.totalorder %v814, 0
      %vm847 = vcmp.ne.s32.totalorder %v821, 0
      %vm848 = vcmp.ne.s32.totalorder %v828, 0
      %vm849 = vcmp.ne.s32.totalorder %v835, 0
      %vm850 = vcmp.ne.s32.totalorder %v842, 0
      %vm851 = vcmp.lt.s32.totalorder %v793, 0
      %vm852 = vcmp.lt.s32.totalorder %v800, 0
      %vm853 = vcmp.lt.s32.totalorder %v807, 0
      %vm854 = vcmp.lt.s32.totalorder %v814, 0
      %vm855 = vcmp.lt.s32.totalorder %v821, 0
      %vm856 = vcmp.lt.s32.totalorder %v828, 0
      %vm857 = vcmp.lt.s32.totalorder %v835, 0
      %vm858 = vcmp.lt.s32.totalorder %v842, 0
      %vm859 = vmand %vm851, %vm843
      %vm860 = vmand %vm852, %vm844
      %vm861 = vmand %vm853, %vm845
      %vm862 = vmand %vm854, %vm846
      %vm863 = vmand %vm855, %vm847
      %vm864 = vmand %vm856, %vm848
      %vm865 = vmand %vm857, %vm849
      %vm866 = vmand %vm858, %vm850
      %v867 = vadd.s32 %v793, 8
      %v868 = vadd.s32 %v800, 8
      %v869 = vadd.s32 %v807, 8
      %v870 = vadd.s32 %v814, 8
      %v871 = vadd.s32 %v821, 8
      %v872 = vadd.s32 %v828, 8
      %v873 = vadd.s32 %v835, 8
      %v874 = vadd.s32 %v842, 8
      %v875 = vsel %vm859, %v867, %v793
      %v876 = vsel %vm860, %v868, %v800
      %v877 = vsel %vm861, %v869, %v807
      %v878 = vsel %vm862, %v870, %v814
      %v879 = vsel %vm863, %v871, %v821
      %v880 = vsel %vm864, %v872, %v828
      %v881 = vsel %vm865, %v873, %v835
      %v882 = vsel %vm866, %v874, %v842
      %vm883 = vcmp.lt.s32.totalorder %v875, 7
      %vm884 = vcmp.lt.s32.totalorder %v876, 7
      %vm885 = vcmp.lt.s32.totalorder %v877, 7
      %vm886 = vcmp.lt.s32.totalorder %v878, 7
      %vm887 = vcmp.lt.s32.totalorder %v879, 7
      %vm888 = vcmp.lt.s32.totalorder %v880, 7
      %vm889 = vcmp.lt.s32.totalorder %v881, 7
      %vm890 = vcmp.lt.s32.totalorder %v882, 7
      %v891 = vsel %vm883, 1, 0
      %v892 = vsel %vm884, 1, 0
      %v893 = vsel %vm885, 1, 0
      %v894 = vsel %vm886, 1, 0
      %v895 = vsel %vm887, 1, 0
      %v896 = vsel %vm888, 1, 0
      %v897 = vsel %vm889, 1, 0
      %v898 = vsel %vm890, 1, 0
      %vm899 = vcmp.eq.s32.totalorder %v891, 1
      %vm900 = vcmp.eq.s32.totalorder %v892, 1
      %vm901 = vcmp.eq.s32.totalorder %v893, 1
      %vm902 = vcmp.eq.s32.totalorder %v894, 1
      %vm903 = vcmp.eq.s32.totalorder %v895, 1
      %vm904 = vcmp.eq.s32.totalorder %v896, 1
      %vm905 = vcmp.eq.s32.totalorder %v897, 1
      %vm906 = vcmp.eq.s32.totalorder %v898, 1
      %v907 = vsel %vm899, %v748, 0.0
      %v908 = vsel %vm900, %v751, 0.0
      %v909 = vsel %vm901, %v756, 0.0
      %v910 = vsel %vm902, %v759, 0.0
      %v911 = vsel %vm903, %v764, 0.0
      %v912 = vsel %vm904, %v767, 0.0
      %v913 = vsel %vm905, %v772, 0.0
      %v914 = vsel %vm906, %v775, 0.0
      %v915 = vadd.f32 %v442, %v907
      %v916 = vadd.f32 %v445, %v908
      %v917 = vadd.f32 %v450, %v909
      %v918 = vadd.f32 %v453, %v910
      %v919 = vadd.f32 %v458, %v911
      %v920 = vadd.f32 %v461, %v912
      %v921 = vadd.f32 %v466, %v913
      %v922 = vadd.f32 %v469, %v914
      %v923 = vld [vmem:[%s2] sm:$0x1]
      %v925 = vlaneseq
      %v926 = vshrl.u32 %v925, 7
      %v927 = vsub.s32 0, %v926
      %v928 = vrot.slane %v923, %v927
      %v930 = vadd.f32 %v915, %v928
      %v931 = vadd.f32 %v916, %v928
      %v932 = vadd.f32 %v917, %v928
      %v933 = vadd.f32 %v918, %v928
      %v934 = vadd.f32 %v919, %v928
      %v935 = vadd.f32 %v920, %v928
      %v936 = vadd.f32 %v921, %v928
      %v937 = vadd.f32 %v922, %v928
      %v938 = vpack.c.bf16 %v931, %v930
      %v939 = vpack.c.bf16 %v933, %v932
      %v940 = vpack.c.bf16 %v935, %v934
      %v941 = vpack.c.bf16 %v937, %v936
      %v946 = vunpack.c.l.b16 %v938
      %v947 = vunpack.c.h.b16 %v938
      %v948 = vunpack.c.l.b16 %v939
      %v949 = vunpack.c.h.b16 %v939
      %v950 = vunpack.c.l.b16 %v940
      %v951 = vunpack.c.h.b16 %v940
      %v952 = vunpack.c.l.b16 %v941
      %v953 = vunpack.c.h.b16 %v941
      %v954 = vpack.c.b16 %v946, %v946
      %v955 = vpack.c.b16 %v947, %v947
      %v956 = vpack.c.b16 %v948, %v948
      %v957 = vpack.c.b16 %v949, %v949
      %v958 = vpack.c.b16 %v950, %v950
      %v959 = vpack.c.b16 %v951, %v951
      %v960 = vpack.c.b16 %v952, %v952
      %v961 = vpack.c.b16 %v953, %v953
      %vm970 = vcmask 257024
      %971 = vst.msk [vmem:[%s170] sm:$0xf] %vm970, %v954
      %972 = vst.msk [vmem:[%s170 + $0x4] sm:$0xf] %vm970, %v955
      %973 = vst.msk [vmem:[%s170 + $0x8] sm:$0xf] %vm970, %v956
      %974 = vst.msk [vmem:[%s170 + $0xc] sm:$0xf] %vm970, %v957
      %975 = vst.msk [vmem:[%s170 + $0x10] sm:$0xf] %vm970, %v958
      %976 = vst.msk [vmem:[%s170 + $0x14] sm:$0xf] %vm970, %v959
      %977 = vst.msk [vmem:[%s170 + $0x18] sm:$0xf] %vm970, %v960
      %978 = vst.msk [vmem:[%s170 + $0x1c] sm:$0xf] %vm970, %v961
      %p979 = scmp.lt.s32.totalorder %s14, 1
      %s980 = scalar_select %p979, %s14, 1
      %s981 = smul.addr %s980, 8
      %s982 = smul.addr %s981, 4
      %s983 = scalar_lea.vmem %s3, %s982
      // Predicated region
      $region33: #{tpu_custom_call.1} parent=31 // pred_check
        %p984 = pneg %p100
      $region34: #{tpu_custom_call.1} parent=31 // pred_check_branch
        %986 = sbr.rel (%p984) target = $region36
      $region35: #{tpu_custom_call.1} parent=31 // pred_region
        _
      $region36: #{tpu_custom_call.1} parent=31 // pred_fallthru
        _
    $region32: #{tpu_custom_call.1} parent=5 // pred_fallthru
      _
    %p987 = scmp.le.s32.totalorder 2, %s9
    // Predicated region
    $region37: #{tpu_custom_call.1} parent=5 // pred_check
      %p988 = pneg %p987
    $region38: #{tpu_custom_call.1} parent=5 // pred_check_branch
      %990 = sbr.rel (%p988) target = $region40
    $region39: #{tpu_custom_call.1} parent=5 // pred_region
      %s991 = ssub.s32 %s9, 2
      // Predicated region
      $region41: #{tpu_custom_call.1} parent=39 // pred_check
        %p992 = pneg %p106
      $region42: #{tpu_custom_call.1} parent=39 // pred_check_branch
        %994 = sbr.rel (%p992) target = $region44
      $region43: #{tpu_custom_call.1} parent=39 // pred_region
        %p995 = scmp.lt.s32.totalorder %s15, 1
        %s996 = scalar_select %p995, %s15, 1
        %s997 = smul.addr %s996, 8
        %s998 = smul.addr %s997, 4
        %s999 = scalar_lea.vmem %s3, %s998
      $region44: #{tpu_custom_call.1} parent=39 // pred_fallthru
        _
    $region40: #{tpu_custom_call.1} parent=5 // pred_fallthru
      _
  $region6: #{tpu_custom_call.1} parent=0 // loop_footer
    %s13 = sadd.s32 1, %s9
  $region7: #{tpu_custom_call.1} parent=0 // loop_footer_branch
    %8 = sbr.rel target = $region3
  $region8: #{tpu_custom_call.1} parent=0 // loop_exit
    _

</llo_original>
